<compile_context>
chip_gen: v5e
topology: v5e:2x2
jax: 0.10.0
libtpu: 0.0.40
codegen_flags: <defaults>
</compile_context>

<pallas_src>
import functools
import math

import jax
import jax.numpy as jnp
from jax.experimental import pallas as pl
from jax.experimental.pallas import tpu as pltpu


def _round_up(v, m):
    return ((v + m - 1) // m) * m


def _layernorm_kernel(x_ref, a_ref, b_ref, o_ref, *, eps, n, hidden_pad):
    x = x_ref[...].astype(jnp.float32)                      # (T, Hp)

    # Mean over the TRUE hidden width (padded lanes are zero, so sum is exact).
    row_sum = jnp.sum(x, axis=-1, keepdims=True)
    mean = row_sum * (1.0 / n)
    diff = x - mean

    if hidden_pad != n:
        # Mask padded lanes out of the variance reduction.
        lane = jax.lax.broadcasted_iota(jnp.int32, x.shape, 1)
        diff_red = jnp.where(lane < n, diff, 0.0)
    else:
        diff_red = diff

    # torch.std default: unbiased estimator (divide by N-1).
    var = jnp.sum(diff_red * diff_red, axis=-1, keepdims=True) * (1.0 / (n - 1))
    std = jnp.sqrt(var)

    # EUP approximate reciprocal on the tiny (T,1) column + one Newton step
    # (restores ~f32 accuracy); avoids a per-element f32 divide on the VPU.
    denom = std + eps
    r = pl.reciprocal(denom, approx=True)
    inv = r * (2.0 - denom * r)

    a = a_ref[...].astype(jnp.float32)                      # (1, Hp)
    b = b_ref[...].astype(jnp.float32)                      # (1, Hp)
    y = diff * inv * a + b
    o_ref[...] = y.astype(o_ref.dtype)


def _pick_row_tile(rows, hidden_pad, itemsize):
    # Per tile-row footprint: double-buffered input + output DMA slabs
    # (4 * itemsize bytes) plus ~3 f32 temporaries (12 bytes) per element.
    per_row = hidden_pad * (4 * itemsize + 12)
    budget = 20 * 1024 * 1024  # conservative: fits v7x (64 MiB VMEM) with headroom
    cap = max(32, min(1024, (budget // per_row) // 32 * 32))
    # Don't over-pad tiny inputs; keep a multiple of 32 (f32/bf16/int8 sublanes).
    return int(min(cap, _round_up(max(rows, 1), 32)))


def layer_norm(x, a_2, b_2, eps=1e-6, *, row_tile=None):
    """LayerNorm over the last axis, matching the PyTorch module exactly
    (unbiased std, eps added to std)."""
    orig_shape = x.shape
    hidden = orig_shape[-1]
    rows = math.prod(orig_shape[:-1]) if len(orig_shape) > 1 else 1

    # Lane-dense hidden axis (multiple of 128) -> unmasked vector stores.
    hidden_pad = _round_up(hidden, 128)
    itemsize = jnp.dtype(x.dtype).itemsize
    if row_tile is None:
        row_tile = _pick_row_tile(rows, hidden_pad, itemsize)
    rows_pad = _round_up(rows, row_tile)

    x2 = x.reshape(rows, hidden)
    x2 = jnp.pad(x2, ((0, rows_pad - rows), (0, hidden_pad - hidden)))
    a2 = jnp.pad(a_2.reshape(1, hidden), ((0, 0), (0, hidden_pad - hidden)))
    b2 = jnp.pad(b_2.reshape(1, hidden), ((0, 0), (0, hidden_pad - hidden)))

    kernel = functools.partial(
        _layernorm_kernel, eps=eps, n=hidden, hidden_pad=hidden_pad
    )

    out = pl.pallas_call(
        kernel,
        out_shape=jax.ShapeDtypeStruct((rows_pad, hidden_pad), x.dtype),
        grid_spec=pltpu.PrefetchScalarGridSpec(
            num_scalar_prefetch=0,
            grid=(rows_pad // row_tile,),
            in_specs=[
                pl.BlockSpec((row_tile, hidden_pad), lambda i: (i, 0)),
                pl.BlockSpec((1, hidden_pad), lambda i: (0, 0)),
                pl.BlockSpec((1, hidden_pad), lambda i: (0, 0)),
            ],
            out_specs=pl.BlockSpec((row_tile, hidden_pad), lambda i: (i, 0)),
        ),
        compiler_params=pltpu.CompilerParams(
            # "parallel" lets Mosaic shard rows across v7x's 2 TensorCores;
            # measured-neutral on v5e/v6e.
            dimension_semantics=("parallel",),
            # Raise scoped VMEM (v5e default is only 16 MiB) so the large,
            # double-buffered row tiles fit; 32 MiB is safe on all generations.
            vmem_limit_bytes=32 * 1024 * 1024,
        ),
    )(x2, a2, b2)

    return out[:rows, :hidden].reshape(orig_shape)


def _reference(x, a_2, b_2, eps=1e-6):
    xf = x.astype(jnp.float32)
    mean = jnp.mean(xf, axis=-1, keepdims=True)
    var = jnp.sum((xf - mean) ** 2, axis=-1, keepdims=True) / (x.shape[-1] - 1)
    std = jnp.sqrt(var)
    return a_2 * (xf - mean) / (std + eps) + b_2


if __name__ == "__main__":
    key = jax.random.PRNGKey(0)
    batch, seq, hidden = 2, 8, 32

    x = jax.random.normal(key, (batch, seq, hidden), dtype=jnp.float32)

    # Deterministic parameter init matching the module's __init__:
    # a_2 = ones(size), b_2 = zeros(size)
    a_2 = jnp.ones((hidden,), dtype=jnp.float32)
    b_2 = jnp.zeros((hidden,), dtype=jnp.float32)

    out = layer_norm(x, a_2, b_2, eps=1e-6)
    out = jax.block_until_ready(out)

    ref = _reference(x, a_2, b_2, eps=1e-6)
    assert out.shape == x.shape
    assert jnp.allclose(out, ref, atol=1e-5, rtol=1e-5), "mismatch vs reference"

    print("KERNEL_OK")
</pallas_src>

<mosaic_0001>
module attributes {stable_mosaic.version = 11 : i64} {
  func.func @_layernorm_kernel(%arg0: i32, %arg1: memref<32x128xf32, #tpu.memory_space<vmem>>, %arg2: memref<1x128xf32, #tpu.memory_space<vmem>>, %arg3: memref<1x128xf32, #tpu.memory_space<vmem>>, %arg4: memref<32x128xf32, #tpu.memory_space<vmem>>) attributes {dimension_semantics = [#tpu.dimension_semantics<parallel>], iteration_bounds = array<i64: 1>, scalar_prefetch = 0 : i64, scratch_operands = 0 : i64, tpu.core_type = #tpu.core_type<tc>, window_params = [{transform_indices = @transform_0, window_bounds = array<i64: 32, 128>}, {pipeline_mode = #tpu.pipeline_mode<synchronous>, transform_indices = @transform_1, window_bounds = array<i64: 1, 128>}, {pipeline_mode = #tpu.pipeline_mode<synchronous>, transform_indices = @transform_2, window_bounds = array<i64: 1, 128>}, {transform_indices = @transform_3, window_bounds = array<i64: 32, 128>}]} {
    %c0 = arith.constant 0 : index
    %c0_0 = arith.constant 0 : index
    %0 = vector.load %arg1[%c0, %c0_0] : memref<32x128xf32, #tpu.memory_space<vmem>>, vector<32x128xf32>
    %cst = arith.constant dense<0.000000e+00> : vector<32xf32>
    %1 = vector.multi_reduction <add>, %0, %cst [1] : vector<32x128xf32> to vector<32xf32>
    %2 = vector.shape_cast %1 : vector<32xf32> to vector<32x1xf32>
    %cst_1 = arith.constant 3.125000e-02 : f32
    %3 = vector.broadcast %cst_1 : f32 to vector<32x1xf32>
    %4 = arith.mulf %2, %3 : vector<32x1xf32>
    %5 = vector.broadcast %4 : vector<32x1xf32> to vector<32x128xf32>
    %6 = arith.subf %0, %5 : vector<32x128xf32>
    %7 = tpu.iota {dimensions = array<i32: 1>} : vector<32x128xi32>
    %c32_i32 = arith.constant 32 : i32
    %8 = vector.broadcast %c32_i32 : i32 to vector<32x128xi32>
    %9 = arith.cmpi slt, %7, %8 : vector<32x128xi32>
    %cst_2 = arith.constant 0.000000e+00 : f32
    %10 = vector.broadcast %cst_2 : f32 to vector<32x128xf32>
    %11 = arith.select %9, %6, %10 : vector<32x128xi1>, vector<32x128xf32>
    %12 = arith.mulf %11, %11 : vector<32x128xf32>
    %cst_3 = arith.constant dense<0.000000e+00> : vector<32xf32>
    %13 = vector.multi_reduction <add>, %12, %cst_3 [1] : vector<32x128xf32> to vector<32xf32>
    %14 = vector.shape_cast %13 : vector<32xf32> to vector<32x1xf32>
    %cst_4 = arith.constant 0.0322580636 : f32
    %15 = vector.broadcast %cst_4 : f32 to vector<32x1xf32>
    %16 = arith.mulf %14, %15 : vector<32x1xf32>
    %17 = math.sqrt %16 : vector<32x1xf32>
    %cst_5 = arith.constant 9.99999997E-7 : f32
    %18 = vector.broadcast %cst_5 : f32 to vector<32x1xf32>
    %19 = arith.addf %17, %18 : vector<32x1xf32>
    %20 = tpu.reciprocal %19 {approx = true} : vector<32x1xf32> -> vector<32x1xf32>
    %21 = arith.mulf %19, %20 : vector<32x1xf32>
    %cst_6 = arith.constant 2.000000e+00 : f32
    %22 = vector.broadcast %cst_6 : f32 to vector<32x1xf32>
    %23 = arith.subf %22, %21 : vector<32x1xf32>
    %24 = arith.mulf %20, %23 : vector<32x1xf32>
    %c0_7 = arith.constant 0 : index
    %c0_8 = arith.constant 0 : index
    %25 = vector.load %arg2[%c0_7, %c0_8] : memref<1x128xf32, #tpu.memory_space<vmem>>, vector<1x128xf32>
    %c0_9 = arith.constant 0 : index
    %c0_10 = arith.constant 0 : index
    %26 = vector.load %arg3[%c0_9, %c0_10] : memref<1x128xf32, #tpu.memory_space<vmem>>, vector<1x128xf32>
    %27 = vector.broadcast %24 : vector<32x1xf32> to vector<32x128xf32>
    %28 = arith.mulf %6, %27 : vector<32x128xf32>
    %29 = vector.broadcast %25 : vector<1x128xf32> to vector<32x128xf32>
    %30 = arith.mulf %28, %29 : vector<32x128xf32>
    %31 = vector.broadcast %26 : vector<1x128xf32> to vector<32x128xf32>
    %32 = arith.addf %30, %31 : vector<32x128xf32>
    %c0_11 = arith.constant 0 : index
    %c0_12 = arith.constant 0 : index
    %33 = vector.load %arg4[%c0_11, %c0_12] : memref<32x128xf32, #tpu.memory_space<vmem>>, vector<32x128xf32>
    tpu.vector_store %arg4[%c0_11, %c0_12], %32 {strides = array<i32>} : memref<32x128xf32, #tpu.memory_space<vmem>>, vector<32x128xf32>,
    return
  }
  func.func @transform_0(%arg0: i32) -> (i32, i32) {
    %c0_i32 = arith.constant 0 : i32
    %c0_i32_0 = arith.constant 0 : i32
    return %arg0, %c0_i32 : i32, i32
  }
  func.func @transform_1(%arg0: i32) -> (i32, i32) {
    %c0_i32 = arith.constant 0 : i32
    %c0_i32_0 = arith.constant 0 : i32
    %c0_i32_1 = arith.constant 0 : i32
    return %c0_i32, %c0_i32_0 : i32, i32
  }
  func.func @transform_2(%arg0: i32) -> (i32, i32) {
    %c0_i32 = arith.constant 0 : i32
    %c0_i32_0 = arith.constant 0 : i32
    %c0_i32_1 = arith.constant 0 : i32
    return %c0_i32, %c0_i32_0 : i32, i32
  }
  func.func @transform_3(%arg0: i32) -> (i32, i32) {
    %c0_i32 = arith.constant 0 : i32
    %c0_i32_0 = arith.constant 0 : i32
    return %arg0, %c0_i32 : i32, i32
  }
}

</mosaic_0001>

<llo_original>
// kernel: tpu_custom_call.1
$region0: #{tpu_custom_call.1}
  #allocation0 [shape = 'u32[]', space=smem, size = 0x4, offset = 0x4, fixed_abs, tag = 'smem constant byte address 0x4 - core index']
  #allocation1 [shape = 'u32[72,128]{1,0:T(1,128)}', space=vmem, size = 0x9000, scoped, tag = 'internal scratch']
  %s0 = inlined_call_operand.hbm [shape: f32[32,128], index: 0, kind: input, shape index: {}]
  %s1 = inlined_call_operand.hbm [shape: f32[1,128], index: 1, kind: input, shape index: {}]
  %s2 = inlined_call_operand.vmem [shape: f32[1,128], index: 2, kind: input, shape index: {}]
  %s3 = inlined_call_operand.hbm [shape: f32[32,128], index: 3, kind: output, shape index: {}]
  %s4 = sld [smem:[#allocation0]]
  $region30: #{tpu_custom_call.1} parent=0
    _
  %s6 = ssub.s32 1, %s4
  %s7 = scalar_select 0, %s6, %s4
  $region1: #{tpu_custom_call.1} parent=0
    #allocation2 [shape = 'u8[16384]{0}', space=vmem, size = 0x4000, scoped, tag = 'input window, operand 0, single buffered']
    #allocation3 [shape = 's32[1]{0}', space=sflag, size = 0x4, scoped, tag = 'scoped memory for tpu_custom_call.1']
    #allocation4 [shape = 's32[1]{0}', space=sflag, size = 0x4, scoped, tag = 'scoped memory for tpu_custom_call.1']
    #allocation5 [shape = 'u8[512]{0}', space=vmem, size = 0x400, scoped, tag = 'input window, operand 1, single buffered']
    #allocation6 [shape = 's32[1]{0}', space=sflag, size = 0x4, scoped, tag = 'scoped memory for tpu_custom_call.1']
    #allocation7 [shape = 'u8[16384]{0}', space=vmem, size = 0x4000, scoped, tag = 'output window, operand 0, single buffered']
    %8 = vsyncpa [#allocation3], 0
    %9 = vsyncpa [#allocation6], 0
    %10 = vsyncpa [#allocation4], 0
    // Predicated region
    $region2: #{tpu_custom_call.1} parent=1 // pred_check
      _
    $region3: #{tpu_custom_call.1} parent=1 // pred_check_branch
      %12 = sbr.rel (0) target = $region5
    $region4: #{tpu_custom_call.1} parent=1 // pred_region
      %14 = vsyncadd [#allocation3], 0
      %s15 = sshll.u32 %s0, 4
      %s16 = int_to_ptr.hbm [resolvable:$true] %s15
      %s17 = sshll.u32 [#allocation2], 4
      %s18 = int_to_ptr.vmem [resolvable:$true] %s17
      %23 = dma.hbm_to_vmem [thread:$0]  %s16, 512, %s18, [#allocation3], 128, 128, 8
    $region5: #{tpu_custom_call.1} parent=1 // pred_fallthru
      _
    // Predicated region
    $region6: #{tpu_custom_call.1} parent=1 // pred_check
      _
    $region7: #{tpu_custom_call.1} parent=1 // pred_check_branch
      %25 = sbr.rel (0) target = $region9
    $region8: #{tpu_custom_call.1} parent=1 // pred_region
      %27 = vsyncadd [#allocation6], 0
      %s29 = sshll.u32 %s1, 4
      %s30 = int_to_ptr.hbm [resolvable:$true] %s29
      %s31 = sshll.u32 [#allocation5], 4
      %s32 = int_to_ptr.vmem [resolvable:$true] %s31
      %34 = dma.hbm_to_vmem [thread:$0]  %s30, 16, %s32, [#allocation6]
    $region9: #{tpu_custom_call.1} parent=1 // pred_fallthru
      _
    // Predicated region
    $region10: #{tpu_custom_call.1} parent=1 // pred_check
      _
    $region11: #{tpu_custom_call.1} parent=1 // pred_check_branch
      %36 = sbr.rel (0) target = $region13
    $region12: #{tpu_custom_call.1} parent=1 // pred_region
      _
    $region13: #{tpu_custom_call.1} parent=1 // pred_fallthru
      _
    // Predicated region
    $region14: #{tpu_custom_call.1} parent=1 // pred_check
      _
    $region15: #{tpu_custom_call.1} parent=1 // pred_check_branch
      %38 = sbr.rel (0) target = $region17
    $region16: #{tpu_custom_call.1} parent=1 // pred_region
      %40 = dma.done [#allocation3], 512
    $region17: #{tpu_custom_call.1} parent=1 // pred_fallthru
      _
    // Predicated region
    $region18: #{tpu_custom_call.1} parent=1 // pred_check
      _
    $region19: #{tpu_custom_call.1} parent=1 // pred_check_branch
      %42 = sbr.rel (0) target = $region21
    $region20: #{tpu_custom_call.1} parent=1 // pred_region
      %44 = dma.done [#allocation6], 16
    $region21: #{tpu_custom_call.1} parent=1 // pred_fallthru
      _
    %v45 = vld [vmem:[#allocation2] sm:$0xff]
    %v46 = vld [vmem:[#allocation2 + $0x8] sm:$0xff]
    %v47 = vld [vmem:[#allocation2 + $0x10] sm:$0xff]
    %v48 = vld [vmem:[#allocation2 + $0x18] sm:$0xff]
    %49 = vadd.xlane.f32.xlu0 %v45
    %v50 = vpop.xlane.xlu0 %49
    %51 = vadd.xlane.f32.xlu0 %v46
    %v52 = vpop.xlane.xlu0 %51
    %53 = vadd.xlane.f32.xlu0 %v47
    %v54 = vpop.xlane.xlu0 %53
    %55 = vadd.xlane.f32.xlu0 %v48
    %v56 = vpop.xlane.xlu0 %55
    %v57 = vmul.f32 %v50, 0.03125
    %v58 = vmul.f32 %v52, 0.03125
    %v59 = vmul.f32 %v54, 0.03125
    %v60 = vmul.f32 %v56, 0.03125
    %v61 = vsub.f32 %v45, %v57
    %v62 = vsub.f32 %v46, %v58
    %v63 = vsub.f32 %v47, %v59
    %v64 = vsub.f32 %v48, %v60
    %v65 = vlaneseq
    %v66 = vand.u32 %v65, 127
    %vm67 = vcmp.lt.s32.totalorder %v66, 32
    %v68 = vsel %vm67, %v61, 0.0
    %v69 = vsel %vm67, %v62, 0.0
    %v70 = vsel %vm67, %v63, 0.0
    %v71 = vsel %vm67, %v64, 0.0
    %v72 = vmul.f32 %v68, %v68
    %v73 = vmul.f32 %v69, %v69
    %v74 = vmul.f32 %v70, %v70
    %v75 = vmul.f32 %v71, %v71
    %76 = vadd.xlane.f32.xlu0 %v72
    %v77 = vpop.xlane.xlu0 %76
    %78 = vadd.xlane.f32.xlu0 %v73
    %v79 = vpop.xlane.xlu0 %78
    %80 = vadd.xlane.f32.xlu0 %v74
    %v81 = vpop.xlane.xlu0 %80
    %82 = vadd.xlane.f32.xlu0 %v75
    %v83 = vpop.xlane.xlu0 %82
    %v84 = vmul.f32 %v77, 0.032258064
    %v85 = vmul.f32 %v79, 0.032258064
    %v86 = vmul.f32 %v81, 0.032258064
    %v87 = vmul.f32 %v83, 0.032258064
    %v88 = vrsqrt.pop %v84
    %v89 = vmul.f32 %v88, %v84
    %v90 = vmul.f32 %v89, %v88
    %v91 = vmul.f32 0.5, %v90
    %v92 = vsub.f32 1.5, %v91
    %v93 = vmul.f32 %v88, %v92
    %v94 = vmul.f32 %v84, %v93
    %vm95 = vcmp.eq.f32.partialorder %v84, inf
    %v96 = vsel %vm95, %v84, %v94
    %vm97 = vcmp.eq.f32.partialorder %v84, 0.0
    %v98 = vand.u32 %v84, 2147483648
    %v99 = vsel %vm97, %v98, %v96
    %v100 = vrsqrt.pop %v85
    %v101 = vmul.f32 %v100, %v85
    %v102 = vmul.f32 %v101, %v100
    %v103 = vmul.f32 0.5, %v102
    %v104 = vsub.f32 1.5, %v103
    %v105 = vmul.f32 %v100, %v104
    %v106 = vmul.f32 %v85, %v105
    %vm107 = vcmp.eq.f32.partialorder %v85, inf
    %v108 = vsel %vm107, %v85, %v106
    %vm109 = vcmp.eq.f32.partialorder %v85, 0.0
    %v110 = vand.u32 %v85, 2147483648
    %v111 = vsel %vm109, %v110, %v108
    %v112 = vrsqrt.pop %v86
    %v113 = vmul.f32 %v112, %v86
    %v114 = vmul.f32 %v113, %v112
    %v115 = vmul.f32 0.5, %v114
    %v116 = vsub.f32 1.5, %v115
    %v117 = vmul.f32 %v112, %v116
    %v118 = vmul.f32 %v86, %v117
    %vm119 = vcmp.eq.f32.partialorder %v86, inf
    %v120 = vsel %vm119, %v86, %v118
    %vm121 = vcmp.eq.f32.partialorder %v86, 0.0
    %v122 = vand.u32 %v86, 2147483648
    %v123 = vsel %vm121, %v122, %v120
    %v124 = vrsqrt.pop %v87
    %v125 = vmul.f32 %v124, %v87
    %v126 = vmul.f32 %v125, %v124
    %v127 = vmul.f32 0.5, %v126
    %v128 = vsub.f32 1.5, %v127
    %v129 = vmul.f32 %v124, %v128
    %v130 = vmul.f32 %v87, %v129
    %vm131 = vcmp.eq.f32.partialorder %v87, inf
    %v132 = vsel %vm131, %v87, %v130
    %vm133 = vcmp.eq.f32.partialorder %v87, 0.0
    %v134 = vand.u32 %v87, 2147483648
    %v135 = vsel %vm133, %v134, %v132
    %v136 = vadd.f32 %v99, 1e-06
    %v137 = vadd.f32 %v111, 1e-06
    %v138 = vadd.f32 %v123, 1e-06
    %v139 = vadd.f32 %v135, 1e-06
    %v140 = vrcp.pop %v136
    %v141 = vrcp.pop %v137
    %v142 = vrcp.pop %v138
    %v143 = vrcp.pop %v139
    %v144 = vmul.f32 %v136, %v140
    %v145 = vmul.f32 %v137, %v141
    %v146 = vmul.f32 %v138, %v142
    %v147 = vmul.f32 %v139, %v143
    %v148 = vsub.f32 2.0, %v144
    %v149 = vsub.f32 2.0, %v145
    %v150 = vsub.f32 2.0, %v146
    %v151 = vsub.f32 2.0, %v147
    %v152 = vmul.f32 %v140, %v148
    %v153 = vmul.f32 %v141, %v149
    %v154 = vmul.f32 %v142, %v150
    %v155 = vmul.f32 %v143, %v151
    %v156 = vld [vmem:[#allocation5] sm:$0x1]
    %v157 = vld [vmem:[%s2] sm:$0x1]
    %v158 = vmul.f32 %v61, %v152
    %v159 = vmul.f32 %v62, %v153
    %v160 = vmul.f32 %v63, %v154
    %v161 = vmul.f32 %v64, %v155
    %v163 = vperm.slane %v156, 0
    %v165 = vmul.f32 %v158, %v163
    %v166 = vmul.f32 %v159, %v163
    %v167 = vmul.f32 %v160, %v163
    %v168 = vmul.f32 %v161, %v163
    %v170 = vperm.slane %v157, 0
    %v172 = vadd.f32 %v165, %v170
    %v173 = vadd.f32 %v166, %v170
    %v174 = vadd.f32 %v167, %v170
    %v175 = vadd.f32 %v168, %v170
    %176 = vst [vmem:[#allocation7] sm:$0xff] %v172
    %177 = vst [vmem:[#allocation7 + $0x8] sm:$0xff] %v173
    %178 = vst [vmem:[#allocation7 + $0x10] sm:$0xff] %v174
    %179 = vst [vmem:[#allocation7 + $0x18] sm:$0xff] %v175
    // Predicated region
    $region22: #{tpu_custom_call.1} parent=1 // pred_check
      _
    $region23: #{tpu_custom_call.1} parent=1 // pred_check_branch
      %181 = sbr.rel (0) target = $region25
    $region24: #{tpu_custom_call.1} parent=1 // pred_region
      %183 = vsyncadd [#allocation4], 0
      %s184 = sshll.u32 [#allocation7], 4
      %s185 = int_to_ptr.vmem [resolvable:$true] %s184
      %s186 = sshll.u32 %s3, 4
      %s187 = int_to_ptr.hbm [resolvable:$true] %s186
      %192 = dma.vmem_to_hbm [thread:$0]  %s185, 512, %s187, [#allocation4], 128, 128, 8
    $region25: #{tpu_custom_call.1} parent=1 // pred_fallthru
      _
    // Predicated region
    $region26: #{tpu_custom_call.1} parent=1 // pred_check
      _
    $region27: #{tpu_custom_call.1} parent=1 // pred_check_branch
      %194 = sbr.rel (0) target = $region29
    $region28: #{tpu_custom_call.1} parent=1 // pred_region
      %196 = dma.done [#allocation4], 512
    $region29: #{tpu_custom_call.1} parent=1 // pred_fallthru
      _
    %197 = vsyncpa [#allocation3], 1
    %198 = vsyncpa [#allocation6], 1
    %199 = vsyncpa [#allocation4], 1

</llo_original>
